<compile_context>
chip_gen: v7x
topology: tpu7x:2x2x1
jax: 0.10.0
libtpu: 0.0.40
codegen_flags: <defaults>
</compile_context>

<pallas_src>
import functools

import jax
import jax.numpy as jnp
from jax.experimental import pallas as pl
from jax.experimental.pallas import tpu as pltpu

HIDDEN = 400       # matches the PyTorch module: nn.Linear(state_dim, 400)
HIDDEN_PAD = 512   # lane/MXU-friendly padded hidden (zero-padded => same math)


def _round_up(x, m):
    return ((x + m - 1) // m) * m


def _actor_kernel(x_ref, w1_ref, b1_ref, w2_ref, b2_ref, w3_ref, b3_ref,
                  out_ref, *, max_action):
    # MXU operands in bf16; accumulation + bias/ReLU/tanh/scale in f32.
    x = x_ref[...].astype(jnp.bfloat16)
    h1 = jnp.dot(x, w1_ref[...], preferred_element_type=jnp.float32)
    h1 = jnp.maximum(h1 + b1_ref[...], 0.0)

    h2 = jnp.dot(h1.astype(jnp.bfloat16), w2_ref[...],
                 preferred_element_type=jnp.float32)
    h2 = jnp.maximum(h2 + b2_ref[...], 0.0)

    a = jnp.dot(h2.astype(jnp.bfloat16), w3_ref[...],
                preferred_element_type=jnp.float32)
    # Single contiguous (TB, 2*A) store; mean/log_std split happens outside.
    out_ref[...] = (max_action * jnp.tanh(a + b3_ref[...])).astype(out_ref.dtype)


def init_actor_nd_params(key, state_dim, action_dim):
    """Deterministic init matching nn.Linear default U(-1/sqrt(fan_in), +).

    Weights are (in_features, out_features) (transpose of PyTorch) so the
    kernel computes y = x @ W + b directly. Hidden size is the module's 400.
    """
    out_dim = 2 * action_dim
    ks = jax.random.split(key, 6)

    def lin(kw, kb, fan_in, fan_out):
        bound = 1.0 / jnp.sqrt(jnp.float32(fan_in))
        w = jax.random.uniform(kw, (fan_in, fan_out), jnp.float32, -bound, bound)
        b = jax.random.uniform(kb, (1, fan_out), jnp.float32, -bound, bound)
        return w, b

    w1, b1 = lin(ks[0], ks[1], state_dim, HIDDEN)
    w2, b2 = lin(ks[2], ks[3], HIDDEN, HIDDEN)
    w3, b3 = lin(ks[4], ks[5], HIDDEN, out_dim)
    return (w1, b1, w2, b2, w3, b3)


def prepare_actor_nd_params(params):
    """Zero-pad hidden 400 -> 512 and cast weights to bf16 (biases stay f32).

    Do this ONCE per set of weights; padding with zeros leaves the forward
    pass mathematically unchanged (ReLU of zero-bias/zero-weight columns is 0
    and padded w3 rows are 0).
    """
    w1, b1, w2, b2, w3, b3 = params
    hp = HIDDEN_PAD - HIDDEN
    w1p = jnp.pad(w1, ((0, 0), (0, hp))).astype(jnp.bfloat16)
    b1p = jnp.pad(b1, ((0, 0), (0, hp))).astype(jnp.float32)
    w2p = jnp.pad(w2, ((0, hp), (0, hp))).astype(jnp.bfloat16)
    b2p = jnp.pad(b2, ((0, 0), (0, hp))).astype(jnp.float32)
    w3p = jnp.pad(w3, ((0, hp), (0, 0))).astype(jnp.bfloat16)
    b3p = b3.astype(jnp.float32)
    return (w1p, b1p, w2p, b2p, w3p, b3p)


@functools.partial(jax.jit,
                   static_argnames=("action_dim", "max_action", "block_b"))
def actor_nd_suff_stats(state, prepared_params, *, action_dim,
                        max_action=1.0, block_b=128):
    """ActorND.forward(state, suff_stats=True) -> (mean, log_std)."""
    w1, b1, w2, b2, w3, b3 = prepared_params
    B, S = state.shape
    out2 = 2 * action_dim

    # Batch tiling: TB rows per grid step (sublane-aligned), weights resident.
    TB = min(block_b, _round_up(B, 8))
    Bp = _round_up(B, TB)
    state_p = state if Bp == B else jnp.pad(state, ((0, Bp - B), (0, 0)))

    kernel = functools.partial(_actor_kernel, max_action=float(max_action))
    const_spec = lambda shape: pl.BlockSpec(shape, lambda i: (0, 0))

    a = pl.pallas_call(
        kernel,
        out_shape=jax.ShapeDtypeStruct((Bp, out2), jnp.float32),
        grid_spec=pltpu.PrefetchScalarGridSpec(
            num_scalar_prefetch=0,
            grid=(Bp // TB,),
            in_specs=[
                pl.BlockSpec((TB, S), lambda i: (i, 0)),   # state tile
                const_spec(w1.shape), const_spec(b1.shape),
                const_spec(w2.shape), const_spec(b2.shape),
                const_spec(w3.shape), const_spec(b3.shape),
            ],
            out_specs=pl.BlockSpec((TB, out2), lambda i: (i, 0)),
        ),
        compiler_params=pltpu.CompilerParams(
            dimension_semantics=("parallel",)),   # shard batch across TCs (v7x)
    )(state_p, w1, b1, w2, b2, w3, b3)

    a = a[:B]
    return a[:, :action_dim], a[:, action_dim:]


def actor_nd_forward(state, prepared_params, *, action_dim, max_action=1.0,
                     training=False, noise_key=None):
    """ActorND.forward(state, suff_stats=False): sample_action(mean, log_std).

    Eval mode (training=False) returns `mean` (matches PyTorch). Training mode:
    action = max_action * tanh(mean + exp(log_std) * eps), eps ~ N(0, 1)
    (rsample). Sampling is tiny elementwise glue on (B, action_dim); the matmul
    hot path lives in the Pallas kernel.
    """
    mean, log_std = actor_nd_suff_stats(state, prepared_params,
                                        action_dim=action_dim,
                                        max_action=max_action)
    if not training:
        return mean
    if noise_key is None:
        noise_key = jax.random.PRNGKey(0)
    eps = jax.random.normal(noise_key, mean.shape, dtype=mean.dtype)
    x_t = mean + jnp.exp(log_std) * eps
    return max_action * jnp.tanh(x_t)


if __name__ == "__main__":
    state_dim = 16
    action_dim = 4
    batch = 8
    max_action = 1.0

    key = jax.random.PRNGKey(0)
    k_param, k_state, k_noise = jax.random.split(key, 3)

    raw_params = init_actor_nd_params(k_param, state_dim, action_dim)
    params = prepare_actor_nd_params(raw_params)   # pad + bf16, done once
    state = jax.random.normal(k_state, (batch, state_dim), dtype=jnp.float32)

    # suff_stats=True path
    mean, log_std = actor_nd_suff_stats(state, params,
                                        action_dim=action_dim,
                                        max_action=max_action)
    # default path, eval mode (returns mean)
    action_eval = actor_nd_forward(state, params, action_dim=action_dim,
                                   max_action=max_action, training=False)
    # default path, training mode (rsample + tanh squash)
    action_train = actor_nd_forward(state, params, action_dim=action_dim,
                                    max_action=max_action, training=True,
                                    noise_key=k_noise)

    jax.block_until_ready((mean, log_std, action_eval, action_train))

    # Tight reference: same bf16-weight / f32-accumulate math in plain JAX.
    w1p, b1p, w2p, b2p, w3p, b3p = params
    h = jnp.maximum(jnp.dot(state.astype(jnp.bfloat16), w1p,
                            preferred_element_type=jnp.float32) + b1p, 0.0)
    h = jnp.maximum(jnp.dot(h.astype(jnp.bfloat16), w2p,
                            preferred_element_type=jnp.float32) + b2p, 0.0)
    a_bf = max_action * jnp.tanh(jnp.dot(h.astype(jnp.bfloat16), w3p,
                                         preferred_element_type=jnp.float32) + b3p)
    assert jnp.allclose(mean, a_bf[:, :action_dim], atol=1e-4, rtol=1e-4)
    assert jnp.allclose(log_std, a_bf[:, action_dim:], atol=1e-4, rtol=1e-4)

    # Loose reference: original full-f32 math (bf16 weights change numerics).
    w1, b1, w2, b2, w3, b3 = raw_params
    hf = jnp.maximum(state @ w1 + b1, 0.0)
    hf = jnp.maximum(hf @ w2 + b2, 0.0)
    a_f32 = max_action * jnp.tanh(hf @ w3 + b3)
    assert jnp.allclose(mean, a_f32[:, :action_dim], atol=5e-2)
    assert jnp.allclose(log_std, a_f32[:, action_dim:], atol=5e-2)
    assert jnp.allclose(action_eval, mean)

    print("KERNEL_OK")
</pallas_src>

<mosaic_0001>
module attributes {stable_mosaic.version = 11 : i64} {
  func.func @_actor_kernel(%arg0: i32, %arg1: memref<8x16xf32, #tpu.memory_space<vmem>>, %arg2: memref<16x512xbf16, #tpu.memory_space<vmem>>, %arg3: memref<1x512xf32, #tpu.memory_space<vmem>>, %arg4: memref<512x512xbf16, #tpu.memory_space<vmem>>, %arg5: memref<1x512xf32, #tpu.memory_space<vmem>>, %arg6: memref<512x8xbf16, #tpu.memory_space<vmem>>, %arg7: memref<1x8xf32, #tpu.memory_space<vmem>>, %arg8: memref<8x8xf32, #tpu.memory_space<vmem>>) attributes {dimension_semantics = [#tpu.dimension_semantics<parallel>], iteration_bounds = array<i64: 1>, scalar_prefetch = 0 : i64, scratch_operands = 0 : i64, tpu.core_type = #tpu.core_type<tc>, window_params = [{transform_indices = @transform_0, window_bounds = array<i64: 8, 16>}, {pipeline_mode = #tpu.pipeline_mode<synchronous>, transform_indices = @transform_1, window_bounds = array<i64: 16, 512>}, {pipeline_mode = #tpu.pipeline_mode<synchronous>, transform_indices = @transform_2, window_bounds = array<i64: 1, 512>}, {pipeline_mode = #tpu.pipeline_mode<synchronous>, transform_indices = @transform_3, window_bounds = array<i64: 512, 512>}, {pipeline_mode = #tpu.pipeline_mode<synchronous>, transform_indices = @transform_4, window_bounds = array<i64: 1, 512>}, {pipeline_mode = #tpu.pipeline_mode<synchronous>, transform_indices = @transform_5, window_bounds = array<i64: 512, 8>}, {pipeline_mode = #tpu.pipeline_mode<synchronous>, transform_indices = @transform_6, window_bounds = array<i64: 1, 8>}, {transform_indices = @transform_7, window_bounds = array<i64: 8, 8>}]} {
    %c0 = arith.constant 0 : index
    %c0_0 = arith.constant 0 : index
    %0 = vector.load %arg1[%c0, %c0_0] : memref<8x16xf32, #tpu.memory_space<vmem>>, vector<8x16xf32>
    %1 = arith.truncf %0 : vector<8x16xf32> to vector<8x16xbf16>
    %c0_1 = arith.constant 0 : index
    %c0_2 = arith.constant 0 : index
    %2 = vector.load %arg2[%c0_1, %c0_2] : memref<16x512xbf16, #tpu.memory_space<vmem>>, vector<16x512xbf16>
    %cst = arith.constant dense<0.000000e+00> : vector<8x512xf32>
    %3 = tpu.matmul %1, %2, %cst {dimension_numbers = #tpu.dot_dimension_numbers<[1], [0], [0], [1], [0, 0, 1, 1], [], []>} : vector<8x16xbf16>, vector<16x512xbf16>, vector<8x512xf32> -> vector<8x512xf32>
    %c0_3 = arith.constant 0 : index
    %c0_4 = arith.constant 0 : index
    %4 = vector.load %arg3[%c0_3, %c0_4] : memref<1x512xf32, #tpu.memory_space<vmem>>, vector<1x512xf32>
    %5 = vector.broadcast %4 : vector<1x512xf32> to vector<8x512xf32>
    %6 = arith.addf %3, %5 : vector<8x512xf32>
    %cst_5 = arith.constant 0.000000e+00 : f32
    %7 = vector.broadcast %cst_5 : f32 to vector<8x512xf32>
    %8 = arith.maximumf %6, %7 : vector<8x512xf32>
    %9 = arith.truncf %8 : vector<8x512xf32> to vector<8x512xbf16>
    %c0_6 = arith.constant 0 : index
    %c0_7 = arith.constant 0 : index
    %10 = vector.load %arg4[%c0_6, %c0_7] : memref<512x512xbf16, #tpu.memory_space<vmem>>, vector<512x512xbf16>
    %cst_8 = arith.constant dense<0.000000e+00> : vector<8x512xf32>
    %11 = tpu.matmul %9, %10, %cst_8 {dimension_numbers = #tpu.dot_dimension_numbers<[1], [0], [0], [1], [0, 0, 1, 1], [], []>} : vector<8x512xbf16>, vector<512x512xbf16>, vector<8x512xf32> -> vector<8x512xf32>
    %c0_9 = arith.constant 0 : index
    %c0_10 = arith.constant 0 : index
    %12 = vector.load %arg5[%c0_9, %c0_10] : memref<1x512xf32, #tpu.memory_space<vmem>>, vector<1x512xf32>
    %13 = vector.broadcast %12 : vector<1x512xf32> to vector<8x512xf32>
    %14 = arith.addf %11, %13 : vector<8x512xf32>
    %cst_11 = arith.constant 0.000000e+00 : f32
    %15 = vector.broadcast %cst_11 : f32 to vector<8x512xf32>
    %16 = arith.maximumf %14, %15 : vector<8x512xf32>
    %17 = arith.truncf %16 : vector<8x512xf32> to vector<8x512xbf16>
    %c0_12 = arith.constant 0 : index
    %c0_13 = arith.constant 0 : index
    %18 = vector.load %arg6[%c0_12, %c0_13] : memref<512x8xbf16, #tpu.memory_space<vmem>>, vector<512x8xbf16>
    %cst_14 = arith.constant dense<0.000000e+00> : vector<8x8xf32>
    %19 = tpu.matmul %17, %18, %cst_14 {dimension_numbers = #tpu.dot_dimension_numbers<[1], [0], [0], [1], [0, 0, 1, 1], [], []>} : vector<8x512xbf16>, vector<512x8xbf16>, vector<8x8xf32> -> vector<8x8xf32>
    %c0_15 = arith.constant 0 : index
    %c0_16 = arith.constant 0 : index
    %20 = vector.load %arg7[%c0_15, %c0_16] : memref<1x8xf32, #tpu.memory_space<vmem>>, vector<1x8xf32>
    %21 = vector.broadcast %20 : vector<1x8xf32> to vector<8x8xf32>
    %22 = arith.addf %19, %21 : vector<8x8xf32>
    %23 = math.tanh %22 : vector<8x8xf32>
    %cst_17 = arith.constant 1.000000e+00 : f32
    %24 = vector.broadcast %cst_17 : f32 to vector<8x8xf32>
    %25 = arith.mulf %24, %23 : vector<8x8xf32>
    %c0_18 = arith.constant 0 : index
    %c0_19 = arith.constant 0 : index
    %26 = vector.load %arg8[%c0_18, %c0_19] : memref<8x8xf32, #tpu.memory_space<vmem>>, vector<8x8xf32>
    tpu.vector_store %arg8[%c0_18, %c0_19], %25 {strides = array<i32>} : memref<8x8xf32, #tpu.memory_space<vmem>>, vector<8x8xf32>,
    return
  }
  func.func @transform_0(%arg0: i32) -> (i32, i32) {
    %c0_i32 = arith.constant 0 : i32
    %c0_i32_0 = arith.constant 0 : i32
    return %arg0, %c0_i32 : i32, i32
  }
  func.func @transform_1(%arg0: i32) -> (i32, i32) {
    %c0_i32 = arith.constant 0 : i32
    %c0_i32_0 = arith.constant 0 : i32
    %c0_i32_1 = arith.constant 0 : i32
    return %c0_i32, %c0_i32_0 : i32, i32
  }
  func.func @transform_2(%arg0: i32) -> (i32, i32) {
    %c0_i32 = arith.constant 0 : i32
    %c0_i32_0 = arith.constant 0 : i32
    %c0_i32_1 = arith.constant 0 : i32
    return %c0_i32, %c0_i32_0 : i32, i32
  }
  func.func @transform_3(%arg0: i32) -> (i32, i32) {
    %c0_i32 = arith.constant 0 : i32
    %c0_i32_0 = arith.constant 0 : i32
    %c0_i32_1 = arith.constant 0 : i32
    return %c0_i32, %c0_i32_0 : i32, i32
  }
  func.func @transform_4(%arg0: i32) -> (i32, i32) {
    %c0_i32 = arith.constant 0 : i32
    %c0_i32_0 = arith.constant 0 : i32
    %c0_i32_1 = arith.constant 0 : i32
    return %c0_i32, %c0_i32_0 : i32, i32
  }
  func.func @transform_5(%arg0: i32) -> (i32, i32) {
    %c0_i32 = arith.constant 0 : i32
    %c0_i32_0 = arith.constant 0 : i32
    %c0_i32_1 = arith.constant 0 : i32
    return %c0_i32, %c0_i32_0 : i32, i32
  }
  func.func @transform_6(%arg0: i32) -> (i32, i32) {
    %c0_i32 = arith.constant 0 : i32
    %c0_i32_0 = arith.constant 0 : i32
    %c0_i32_1 = arith.constant 0 : i32
    return %c0_i32, %c0_i32_0 : i32, i32
  }
  func.func @transform_7(%arg0: i32) -> (i32, i32) {
    %c0_i32 = arith.constant 0 : i32
    %c0_i32_0 = arith.constant 0 : i32
    return %arg0, %c0_i32 : i32, i32
  }
}

</mosaic_0001>

<llo_original>
// kernel: actor_nd_suff_stats.1
$region0: #{actor_nd_suff_stats.1}
  #allocation0 [shape = 'u32[]', space=smem, size = 0x4, offset = 0x4, fixed_abs, tag = 'smem constant byte address 0x4 - core index']
  #allocation1 [shape = 'u32[144,128]{1,0:T(1,128)}', space=vmem, size = 0x12000, scoped, tag = 'internal scratch']
  %s0 = inlined_call_operand.vmem [shape: f32[8,16], index: 0, kind: input, shape index: {}]
  %s1 = inlined_call_operand.vmem [shape: bf16[16,512], index: 1, kind: input, shape index: {}]
  %s2 = inlined_call_operand.vmem [shape: f32[1,512], index: 2, kind: input, shape index: {}]
  %s3 = inlined_call_operand.hbm [shape: bf16[512,512], index: 3, kind: input, shape index: {}]
  %s4 = inlined_call_operand.vmem [shape: f32[1,512], index: 4, kind: input, shape index: {}]
  %s5 = inlined_call_operand.vmem [shape: bf16[512,8], index: 5, kind: input, shape index: {}]
  %s6 = inlined_call_operand.vmem [shape: f32[1,8], index: 6, kind: input, shape index: {}]
  %s7 = inlined_call_operand.vmem [shape: f32[8,8], index: 7, kind: output, shape index: {}]
  %s8 = sld [smem:[#allocation0]]
  $region42: #{actor_nd_suff_stats.1} parent=0
    _
  %s10 = ssub.s32 1, %s8
  %s11 = scalar_select 0, %s10, %s8
  $region1: #{actor_nd_suff_stats.1} parent=0
    #allocation2 [shape = 'u8[524288]{0}', space=vmem, size = 0x80000, scoped, tag = 'input window, operand 3, single buffered']
    #allocation3 [shape = 's32[1]{0}', space=sflag, size = 0x4, scoped, tag = 'scoped memory for actor_nd_suff_stats.1']
    %12 = vsyncpa [#allocation3], 0
    // Predicated region
    $region2: #{actor_nd_suff_stats.1} parent=1 // pred_check
      _
    $region3: #{actor_nd_suff_stats.1} parent=1 // pred_check_branch
      %14 = sbr.rel (0) target = $region5
    $region4: #{actor_nd_suff_stats.1} parent=1 // pred_region
      _
    $region5: #{actor_nd_suff_stats.1} parent=1 // pred_fallthru
      _
    // Predicated region
    $region6: #{actor_nd_suff_stats.1} parent=1 // pred_check
      _
    $region7: #{actor_nd_suff_stats.1} parent=1 // pred_check_branch
      %16 = sbr.rel (0) target = $region9
    $region8: #{actor_nd_suff_stats.1} parent=1 // pred_region
      _
    $region9: #{actor_nd_suff_stats.1} parent=1 // pred_fallthru
      _
    // Predicated region
    $region10: #{actor_nd_suff_stats.1} parent=1 // pred_check
      _
    $region11: #{actor_nd_suff_stats.1} parent=1 // pred_check_branch
      %18 = sbr.rel (0) target = $region13
    $region12: #{actor_nd_suff_stats.1} parent=1 // pred_region
      _
    $region13: #{actor_nd_suff_stats.1} parent=1 // pred_fallthru
      _
    // Predicated region
    $region14: #{actor_nd_suff_stats.1} parent=1 // pred_check
      _
    $region15: #{actor_nd_suff_stats.1} parent=1 // pred_check_branch
      %20 = sbr.rel (0) target = $region17
    $region16: #{actor_nd_suff_stats.1} parent=1 // pred_region
      %s22 = ssub.s32 16384, 16384
      %23 = vsyncadd [#allocation3], %s22
      %s24 = sshll.u32 [#allocation2], 4
      %s25 = int_to_ptr.vmem [resolvable:$true] %s24
      %30 = dma.hbm_to_vmem [thread:$0]  %s3, 16384, %s25, [#allocation3], 256, 256, 16
    $region17: #{actor_nd_suff_stats.1} parent=1 // pred_fallthru
      _
    // Predicated region
    $region18: #{actor_nd_suff_stats.1} parent=1 // pred_check
      _
    $region19: #{actor_nd_suff_stats.1} parent=1 // pred_check_branch
      %32 = sbr.rel (0) target = $region21
    $region20: #{actor_nd_suff_stats.1} parent=1 // pred_region
      _
    $region21: #{actor_nd_suff_stats.1} parent=1 // pred_fallthru
      _
    // Predicated region
    $region22: #{actor_nd_suff_stats.1} parent=1 // pred_check
      _
    $region23: #{actor_nd_suff_stats.1} parent=1 // pred_check_branch
      %34 = sbr.rel (0) target = $region25
    $region24: #{actor_nd_suff_stats.1} parent=1 // pred_region
      _
    $region25: #{actor_nd_suff_stats.1} parent=1 // pred_fallthru
      _
    // Predicated region
    $region26: #{actor_nd_suff_stats.1} parent=1 // pred_check
      _
    $region27: #{actor_nd_suff_stats.1} parent=1 // pred_check_branch
      %36 = sbr.rel (0) target = $region29
    $region28: #{actor_nd_suff_stats.1} parent=1 // pred_region
      _
    $region29: #{actor_nd_suff_stats.1} parent=1 // pred_fallthru
      _
    // Predicated region
    $region30: #{actor_nd_suff_stats.1} parent=1 // pred_check
      _
    $region31: #{actor_nd_suff_stats.1} parent=1 // pred_check_branch
      %38 = sbr.rel (0) target = $region33
    $region32: #{actor_nd_suff_stats.1} parent=1 // pred_region
      %39 = dma.done [#allocation3], 16384
    $region33: #{actor_nd_suff_stats.1} parent=1 // pred_fallthru
      _
    %v41 = vld [vmem:[%s0] sm:$0xff]
    %v42 = vpack.c.bf16 %v41, %v41
    %v43 = vld [vmem:[%s1] sm:$0xff]
    %v44 = vld [vmem:[%s1 + $0x8] sm:$0xff]
    %v45 = vld [vmem:[%s1 + $0x10] sm:$0xff]
    %v46 = vld [vmem:[%s1 + $0x18] sm:$0xff]
    %v47 = vld [vmem:[%s2] sm:$0xf]
    %v49 = vlaneseq
    %v50 = vshrl.u32 %v49, 7
    %v51 = vsub.s32 0, %v50
    %v52 = vrot.slane %v47, %v51
    %v53 = vlaneseq
    %v54 = vshrl.u32 %v53, 7
    %v55 = vsub.s32 1, %v54
    %v56 = vrot.slane %v47, %v55
    %v57 = vlaneseq
    %v58 = vshrl.u32 %v57, 7
    %v59 = vsub.s32 2, %v58
    %v60 = vrot.slane %v47, %v59
    %v61 = vlaneseq
    %v62 = vshrl.u32 %v61, 7
    %v63 = vsub.s32 3, %v62
    %v64 = vrot.slane %v47, %v63
    %v73 = vunpack.c.l.b16 %v43
    %v74 = vunpack.c.h.b16 %v43
    %v75 = vunpack.c.l.b16 %v44
    %v76 = vunpack.c.h.b16 %v44
    %v77 = vunpack.c.l.b16 %v45
    %v78 = vunpack.c.h.b16 %v45
    %v79 = vunpack.c.l.b16 %v46
    %v80 = vunpack.c.h.b16 %v46
    %v81 = vpack.c.b16 %v77, %v73
    %v82 = vpack.c.b16 %v78, %v74
    %v83 = vpack.c.b16 %v79, %v75
    %v84 = vpack.c.b16 %v80, %v76
    %vm89 = vcmask 130048
    %v91 = vsel %vm89, %v42, 0
    %93 = vmatprep.subr.bf16.mxu0 %v82
    %94 = vmatpush1.bf16.msra.mxu0 %v81
    %95 = vmatprep.subr.bf16.mxu0 0
    %96 = vmatpush1.bf16.msra.mxu0 0
    %97 = vmatprep.subr.bf16.mxu0 0
    %98 = vmatpush1.bf16.msra.mxu0 0
    %99 = vmatprep.subr.bf16.mxu0 0
    %100 = vmatpush1.bf16.msra.mxu0 0
    %101 = vmatprep.subr.bf16.mxu0 0
    %102 = vmatpush1.bf16.msra.mxu0 0
    %103 = vmatprep.subr.bf16.mxu0 0
    %104 = vmatpush1.bf16.msra.mxu0 0
    %105 = vmatprep.subr.bf16.mxu0 0
    %106 = vmatpush1.bf16.msra.mxu0 0
    %107 = vmatprep.subr.bf16.mxu0 0
    %108 = vmatpush1.bf16.msra.mxu0 0
    %109 = vmatprep.subr.bf16.mxu0 0
    %110 = vmatpush1.bf16.msra.mxu0 0
    %111 = vmatprep.subr.bf16.mxu0 0
    %112 = vmatpush1.bf16.msra.mxu0 0
    %113 = vmatprep.subr.bf16.mxu0 0
    %114 = vmatpush1.bf16.msra.mxu0 0
    %115 = vmatprep.subr.bf16.mxu0 0
    %116 = vmatpush1.bf16.msra.mxu0 0
    %117 = vmatprep.subr.bf16.mxu0 0
    %118 = vmatpush1.bf16.msra.mxu0 0
    %119 = vmatprep.subr.bf16.mxu0 0
    %120 = vmatpush1.bf16.msra.mxu0 0
    %121 = vmatprep.subr.bf16.mxu0 0
    %122 = vmatpush1.bf16.msra.mxu0 0
    %123 = vmatprep.subr.bf16.mxu0 0
    %124 = vmatpush1.bf16.msra.mxu0 0
    %125 = vmatprep.mubr.bf16.mxu0 0
    %126 = vmatmul.mubr.bf16.gmra.mrb[0].mxu0 %v91
    %v127 = vpop.f32.mrb[0].mxu0
    %v128 = vadd.f32 %v52, %v127
    %v129 = vpop.f32.mrb[0].mxu0
    %v130 = vadd.f32 %v56, %v129
    %v131 = vpop.f32.mrb[0].mxu0
    %v132 = vpop.f32.mrb[0].mxu0
    %133 = vdwg.mxu0
    %134 = vmatprep.subr.bf16.mxu0 %v84
    %135 = vmatpush1.bf16.msra.mxu0 %v83
    %136 = vmatprep.subr.bf16.mxu0 0
    %137 = vmatpush1.bf16.msra.mxu0 0
    %138 = vmatprep.subr.bf16.mxu0 0
    %139 = vmatpush1.bf16.msra.mxu0 0
    %140 = vmatprep.subr.bf16.mxu0 0
    %141 = vmatpush1.bf16.msra.mxu0 0
    %142 = vmatprep.subr.bf16.mxu0 0
    %143 = vmatpush1.bf16.msra.mxu0 0
    %144 = vmatprep.subr.bf16.mxu0 0
    %145 = vmatpush1.bf16.msra.mxu0 0
    %146 = vmatprep.subr.bf16.mxu0 0
    %147 = vmatpush1.bf16.msra.mxu0 0
    %148 = vmatprep.subr.bf16.mxu0 0
    %149 = vmatpush1.bf16.msra.mxu0 0
    %150 = vmatprep.subr.bf16.mxu0 0
    %151 = vmatpush1.bf16.msra.mxu0 0
    %152 = vmatprep.subr.bf16.mxu0 0
    %153 = vmatpush1.bf16.msra.mxu0 0
    %154 = vmatprep.subr.bf16.mxu0 0
    %155 = vmatpush1.bf16.msra.mxu0 0
    %156 = vmatprep.subr.bf16.mxu0 0
    %157 = vmatpush1.bf16.msra.mxu0 0
    %158 = vmatprep.subr.bf16.mxu0 0
    %159 = vmatpush1.bf16.msra.mxu0 0
    %160 = vmatprep.subr.bf16.mxu0 0
    %161 = vmatpush1.bf16.msra.mxu0 0
    %162 = vmatprep.subr.bf16.mxu0 0
    %163 = vmatpush1.bf16.msra.mxu0 0
    %164 = vmatprep.subr.bf16.mxu0 0
    %165 = vmatpush1.bf16.msra.mxu0 0
    %166 = vmatprep.mubr.bf16.mxu0 0
    %167 = vmatmul.mubr.bf16.gmra.mrb[0].mxu0 %v91
    %v168 = vpop.f32.mrb[0].mxu0
    %v169 = vadd.f32 %v60, %v168
    %v170 = vpop.f32.mrb[0].mxu0
    %v171 = vadd.f32 %v64, %v170
    %v172 = vpop.f32.mrb[0].mxu0
    %v173 = vpop.f32.mrb[0].mxu0
    %174 = vdwg.mxu0
    %v175 = vmax.f32 %v128, 0.0
    %v176 = vmax.f32 %v130, 0.0
    %v177 = vmax.f32 %v169, 0.0
    %v178 = vmax.f32 %v171, 0.0
    %v179 = vpack.c.bf16 %v175, %v175
    %v180 = vpack.c.bf16 %v176, %v176
    %v181 = vpack.c.bf16 %v177, %v177
    %v182 = vpack.c.bf16 %v178, %v178
    %v183 = vld [vmem:[#allocation2] sm:$0xff]
    %v184 = vld [vmem:[#allocation2 + $0x8] sm:$0xff]
    %v185 = vld [vmem:[#allocation2 + $0x10] sm:$0xff]
    %v186 = vld [vmem:[#allocation2 + $0x18] sm:$0xff]
    %v187 = vld [vmem:[#allocation2 + $0x20] sm:$0xff]
    %v188 = vld [vmem:[#allocation2 + $0x28] sm:$0xff]
    %v189 = vld [vmem:[#allocation2 + $0x30] sm:$0xff]
    %v190 = vld [vmem:[#allocation2 + $0x38] sm:$0xff]
    %v191 = vld [vmem:[#allocation2 + $0x40] sm:$0xff]
    %v192 = vld [vmem:[#allocation2 + $0x48] sm:$0xff]
    %v193 = vld [vmem:[#allocation2 + $0x50] sm:$0xff]
    %v194 = vld [vmem:[#allocation2 + $0x58] sm:$0xff]
    %v195 = vld [vmem:[#allocation2 + $0x60] sm:$0xff]
    %v196 = vld [vmem:[#allocation2 + $0x68] sm:$0xff]
    %v197 = vld [vmem:[#allocation2 + $0x70] sm:$0xff]
    %v198 = vld [vmem:[#allocation2 + $0x78] sm:$0xff]
    %v199 = vld [vmem:[#allocation2 + $0x80] sm:$0xff]
    %v200 = vld [vmem:[#allocation2 + $0x88] sm:$0xff]
    %v201 = vld [vmem:[#allocation2 + $0x90] sm:$0xff]
    %v202 = vld [vmem:[#allocation2 + $0x98] sm:$0xff]
    %v203 = vld [vmem:[#allocation2 + $0xa0] sm:$0xff]
    %v204 = vld [vmem:[#allocation2 + $0xa8] sm:$0xff]
    %v205 = vld [vmem:[#allocation2 + $0xb0] sm:$0xff]
    %v206 = vld [vmem:[#allocation2 + $0xb8] sm:$0xff]
    %v207 = vld [vmem:[#allocation2 + $0xc0] sm:$0xff]
    %v208 = vld [vmem:[#allocation2 + $0xc8] sm:$0xff]
    %v209 = vld [vmem:[#allocation2 + $0xd0] sm:$0xff]
    %v210 = vld [vmem:[#allocation2 + $0xd8] sm:$0xff]
    %v211 = vld [vmem:[#allocation2 + $0xe0] sm:$0xff]
    %v212 = vld [vmem:[#allocation2 + $0xe8] sm:$0xff]
    %v213 = vld [vmem:[#allocation2 + $0xf0] sm:$0xff]
    %v214 = vld [vmem:[#allocation2 + $0xf8] sm:$0xff]
    %v215 = vld [vmem:[#allocation2 + $0x100] sm:$0xff]
    %v216 = vld [vmem:[#allocation2 + $0x108] sm:$0xff]
    %v217 = vld [vmem:[#allocation2 + $0x110] sm:$0xff]
    %v218 = vld [vmem:[#allocation2 + $0x118] sm:$0xff]
    %v219 = vld [vmem:[#allocation2 + $0x120] sm:$0xff]
    %v220 = vld [vmem:[#allocation2 + $0x128] sm:$0xff]
    %v221 = vld [vmem:[#allocation2 + $0x130] sm:$0xff]
    %v222 = vld [vmem:[#allocation2 + $0x138] sm:$0xff]
    %v223 = vld [vmem:[#allocation2 + $0x140] sm:$0xff]
    %v224 = vld [vmem:[#allocation2 + $0x148] sm:$0xff]
    %v225 = vld [vmem:[#allocation2 + $0x150] sm:$0xff]
    %v226 = vld [vmem:[#allocation2 + $0x158] sm:$0xff]
    %v227 = vld [vmem:[#allocation2 + $0x160] sm:$0xff]
    %v228 = vld [vmem:[#allocation2 + $0x168] sm:$0xff]
    %v229 = vld [vmem:[#allocation2 + $0x170] sm:$0xff]
    %v230 = vld [vmem:[#allocation2 + $0x178] sm:$0xff]
    %v231 = vld [vmem:[#allocation2 + $0x180] sm:$0xff]
    %v232 = vld [vmem:[#allocation2 + $0x188] sm:$0xff]
    %v233 = vld [vmem:[#allocation2 + $0x190] sm:$0xff]
    %v234 = vld [vmem:[#allocation2 + $0x198] sm:$0xff]
    %v235 = vld [vmem:[#allocation2 + $0x1a0] sm:$0xff]
    %v236 = vld [vmem:[#allocation2 + $0x1a8] sm:$0xff]
    %v237 = vld [vmem:[#allocation2 + $0x1b0] sm:$0xff]
    %v238 = vld [vmem:[#allocation2 + $0x1b8] sm:$0xff]
    %v239 = vld [vmem:[#allocation2 + $0x1c0] sm:$0xff]
    %v240 = vld [vmem:[#allocation2 + $0x1c8] sm:$0xff]
    %v241 = vld [vmem:[#allocation2 + $0x1d0] sm:$0xff]
    %v242 = vld [vmem:[#allocation2 + $0x1d8] sm:$0xff]
    %v243 = vld [vmem:[#allocation2 + $0x1e0] sm:$0xff]
    %v244 = vld [vmem:[#allocation2 + $0x1e8] sm:$0xff]
    %v245 = vld [vmem:[#allocation2 + $0x1f0] sm:$0xff]
    %v246 = vld [vmem:[#allocation2 + $0x1f8] sm:$0xff]
    %v247 = vld [vmem:[#allocation2 + $0x200] sm:$0xff]
    %v248 = vld [vmem:[#allocation2 + $0x208] sm:$0xff]
    %v249 = vld [vmem:[#allocation2 + $0x210] sm:$0xff]
    %v250 = vld [vmem:[#allocation2 + $0x218] sm:$0xff]
    %v251 = vld [vmem:[#allocation2 + $0x220] sm:$0xff]
    %v252 = vld [vmem:[#allocation2 + $0x228] sm:$0xff]
    %v253 = vld [vmem:[#allocation2 + $0x230] sm:$0xff]
    %v254 = vld [vmem:[#allocation2 + $0x238] sm:$0xff]
    %v255 = vld [vmem:[#allocation2 + $0x240] sm:$0xff]
    %v256 = vld [vmem:[#allocation2 + $0x248] sm:$0xff]
    %v257 = vld [vmem:[#allocation2 + $0x250] sm:$0xff]
    %v258 = vld [vmem:[#allocation2 + $0x258] sm:$0xff]
    %v259 = vld [vmem:[#allocation2 + $0x260] sm:$0xff]
    %v260 = vld [vmem:[#allocation2 + $0x268] sm:$0xff]
    %v261 = vld [vmem:[#allocation2 + $0x270] sm:$0xff]
    %v262 = vld [vmem:[#allocation2 + $0x278] sm:$0xff]
    %v263 = vld [vmem:[#allocation2 + $0x280] sm:$0xff]
    %v264 = vld [vmem:[#allocation2 + $0x288] sm:$0xff]
    %v265 = vld [vmem:[#allocation2 + $0x290] sm:$0xff]
    %v266 = vld [vmem:[#allocation2 + $0x298] sm:$0xff]
    %v267 = vld [vmem:[#allocation2 + $0x2a0] sm:$0xff]
    %v268 = vld [vmem:[#allocation2 + $0x2a8] sm:$0xff]
    %v269 = vld [vmem:[#allocation2 + $0x2b0] sm:$0xff]
    %v270 = vld [vmem:[#allocation2 + $0x2b8] sm:$0xff]
    %v271 = vld [vmem:[#allocation2 + $0x2c0] sm:$0xff]
    %v272 = vld [vmem:[#allocation2 + $0x2c8] sm:$0xff]
    %v273 = vld [vmem:[#allocation2 + $0x2d0] sm:$0xff]
    %v274 = vld [vmem:[#allocation2 + $0x2d8] sm:$0xff]
    %v275 = vld [vmem:[#allocation2 + $0x2e0] sm:$0xff]
    %v276 = vld [vmem:[#allocation2 + $0x2e8] sm:$0xff]
    %v277 = vld [vmem:[#allocation2 + $0x2f0] sm:$0xff]
    %v278 = vld [vmem:[#allocation2 + $0x2f8] sm:$0xff]
    %v279 = vld [vmem:[#allocation2 + $0x300] sm:$0xff]
    %v280 = vld [vmem:[#allocation2 + $0x308] sm:$0xff]
    %v281 = vld [vmem:[#allocation2 + $0x310] sm:$0xff]
    %v282 = vld [vmem:[#allocation2 + $0x318] sm:$0xff]
    %v283 = vld [vmem:[#allocation2 + $0x320] sm:$0xff]
    %v284 = vld [vmem:[#allocation2 + $0x328] sm:$0xff]
    %v285 = vld [vmem:[#allocation2 + $0x330] sm:$0xff]
    %v286 = vld [vmem:[#allocation2 + $0x338] sm:$0xff]
    %v287 = vld [vmem:[#allocation2 + $0x340] sm:$0xff]
    %v288 = vld [vmem:[#allocation2 + $0x348] sm:$0xff]
    %v289 = vld [vmem:[#allocation2 + $0x350] sm:$0xff]
    %v290 = vld [vmem:[#allocation2 + $0x358] sm:$0xff]
    %v291 = vld [vmem:[#allocation2 + $0x360] sm:$0xff]
    %v292 = vld [vmem:[#allocation2 + $0x368] sm:$0xff]
    %v293 = vld [vmem:[#allocation2 + $0x370] sm:$0xff]
    %v294 = vld [vmem:[#allocation2 + $0x378] sm:$0xff]
    %v295 = vld [vmem:[#allocation2 + $0x380] sm:$0xff]
    %v296 = vld [vmem:[#allocation2 + $0x388] sm:$0xff]
    %v297 = vld [vmem:[#allocation2 + $0x390] sm:$0xff]
    %v298 = vld [vmem:[#allocation2 + $0x398] sm:$0xff]
    %v299 = vld [vmem:[#allocation2 + $0x3a0] sm:$0xff]
    %v300 = vld [vmem:[#allocation2 + $0x3a8] sm:$0xff]
    %v301 = vld [vmem:[#allocation2 + $0x3b0] sm:$0xff]
    %v302 = vld [vmem:[#allocation2 + $0x3b8] sm:$0xff]
    %v303 = vld [vmem:[#allocation2 + $0x3c0] sm:$0xff]
    %v304 = vld [vmem:[#allocation2 + $0x3c8] sm:$0xff]
    %v305 = vld [vmem:[#allocation2 + $0x3d0] sm:$0xff]
    %v306 = vld [vmem:[#allocation2 + $0x3d8] sm:$0xff]
    %v307 = vld [vmem:[#allocation2 + $0x3e0] sm:$0xff]
    %v308 = vld [vmem:[#allocation2 + $0x3e8] sm:$0xff]
    %v309 = vld [vmem:[#allocation2 + $0x3f0] sm:$0xff]
    %v310 = vld [vmem:[#allocation2 + $0x3f8] sm:$0xff]
    %v311 = vld [vmem:[%s4] sm:$0xf]
    %v313 = vlaneseq
    %v314 = vshrl.u32 %v313, 7
    %v315 = vsub.s32 0, %v314
    %v316 = vrot.slane %v311, %v315
    %v317 = vlaneseq
    %v318 = vshrl.u32 %v317, 7
    %v319 = vsub.s32 1, %v318
    %v320 = vrot.slane %v311, %v319
    %v321 = vlaneseq
    %v322 = vshrl.u32 %v321, 7
    %v323 = vsub.s32 2, %v322
    %v324 = vrot.slane %v311, %v323
    %v325 = vlaneseq
    %v326 = vshrl.u32 %v325, 7
    %v327 = vsub.s32 3, %v326
    %v328 = vrot.slane %v311, %v327
    %v461 = vunpack.c.l.b16 %v183
    %v462 = vunpack.c.h.b16 %v183
    %v463 = vunpack.c.l.b16 %v184
    %v464 = vunpack.c.h.b16 %v184
    %v465 = vunpack.c.l.b16 %v185
    %v466 = vunpack.c.h.b16 %v185
    %v467 = vunpack.c.l.b16 %v186
    %v468 = vunpack.c.h.b16 %v186
    %v469 = vunpack.c.l.b16 %v187
    %v470 = vunpack.c.h.b16 %v187
    %v471 = vunpack.c.l.b16 %v188
    %v472 = vunpack.c.h.b16 %v188
    %v473 = vunpack.c.l.b16 %v189
    %v474 = vunpack.c.h.b16 %v189
    %v475 = vunpack.c.l.b16 %v190
    %v476 = vunpack.c.h.b16 %v190
    %v477 = vunpack.c.l.b16 %v191
    %v478 = vunpack.c.h.b16 %v191
    %v479 = vunpack.c.l.b16 %v192
    %v480 = vunpack.c.h.b16 %v192
    %v481 = vunpack.c.l.b16 %v193
    %v482 = vunpack.c.h.b16 %v193
    %v483 = vunpack.c.l.b16 %v194
    %v484 = vunpack.c.h.b16 %v194
    %v485 = vunpack.c.l.b16 %v195
    %v486 = vunpack.c.h.b16 %v195
    %v487 = vunpack.c.l.b16 %v196
    %v488 = vunpack.c.h.b16 %v196
    %v489 = vunpack.c.l.b16 %v197
    %v490 = vunpack.c.h.b16 %v197
    %v491 = vunpack.c.l.b16 %v198
    %v492 = vunpack.c.h.b16 %v198
    %v493 = vunpack.c.l.b16 %v199
    %v494 = vunpack.c.h.b16 %v199
    %v495 = vunpack.c.l.b16 %v200
    %v496 = vunpack.c.h.b16 %v200
    %v497 = vunpack.c.l.b16 %v201
    %v498 = vunpack.c.h.b16 %v201
    %v499 = vunpack.c.l.b16 %v202
    %v500 = vunpack.c.h.b16 %v202
    %v501 = vunpack.c.l.b16 %v203
    %v502 = vunpack.c.h.b16 %v203
    %v503 = vunpack.c.l.b16 %v204
    %v504 = vunpack.c.h.b16 %v204
    %v505 = vunpack.c.l.b16 %v205
    %v506 = vunpack.c.h.b16 %v205
    %v507 = vunpack.c.l.b16 %v206
    %v508 = vunpack.c.h.b16 %v206
    %v509 = vunpack.c.l.b16 %v207
    %v510 = vunpack.c.h.b16 %v207
    %v511 = vunpack.c.l.b16 %v208
    %v512 = vunpack.c.h.b16 %v208
    %v513 = vunpack.c.l.b16 %v209
    %v514 = vunpack.c.h.b16 %v209
    %v515 = vunpack.c.l.b16 %v210
    %v516 = vunpack.c.h.b16 %v210
    %v517 = vunpack.c.l.b16 %v211
    %v518 = vunpack.c.h.b16 %v211
    %v519 = vunpack.c.l.b16 %v212
    %v520 = vunpack.c.h.b16 %v212
    %v521 = vunpack.c.l.b16 %v213
    %v522 = vunpack.c.h.b16 %v213
    %v523 = vunpack.c.l.b16 %v214
    %v524 = vunpack.c.h.b16 %v214
    %v525 = vunpack.c.l.b16 %v215
    %v526 = vunpack.c.h.b16 %v215
    %v527 = vunpack.c.l.b16 %v216
    %v528 = vunpack.c.h.b16 %v216
    %v529 = vunpack.c.l.b16 %v217
    %v530 = vunpack.c.h.b16 %v217
    %v531 = vunpack.c.l.b16 %v218
    %v532 = vunpack.c.h.b16 %v218
    %v533 = vunpack.c.l.b16 %v219
    %v534 = vunpack.c.h.b16 %v219
    %v535 = vunpack.c.l.b16 %v220
    %v536 = vunpack.c.h.b16 %v220
    %v537 = vunpack.c.l.b16 %v221
    %v538 = vunpack.c.h.b16 %v221
    %v539 = vunpack.c.l.b16 %v222
    %v540 = vunpack.c.h.b16 %v222
    %v541 = vunpack.c.l.b16 %v223
    %v542 = vunpack.c.h.b16 %v223
    %v543 = vunpack.c.l.b16 %v224
    %v544 = vunpack.c.h.b16 %v224
    %v545 = vunpack.c.l.b16 %v225
    %v546 = vunpack.c.h.b16 %v225
    %v547 = vunpack.c.l.b16 %v226
    %v548 = vunpack.c.h.b16 %v226
    %v549 = vunpack.c.l.b16 %v227
    %v550 = vunpack.c.h.b16 %v227
    %v551 = vunpack.c.l.b16 %v228
    %v552 = vunpack.c.h.b16 %v228
    %v553 = vunpack.c.l.b16 %v229
    %v554 = vunpack.c.h.b16 %v229
    %v555 = vunpack.c.l.b16 %v230
    %v556 = vunpack.c.h.b16 %v230
    %v557 = vunpack.c.l.b16 %v231
    %v558 = vunpack.c.h.b16 %v231
    %v559 = vunpack.c.l.b16 %v232
    %v560 = vunpack.c.h.b16 %v232
    %v561 = vunpack.c.l.b16 %v233
    %v562 = vunpack.c.h.b16 %v233
    %v563 = vunpack.c.l.b16 %v234
    %v564 = vunpack.c.h.b16 %v234
    %v565 = vunpack.c.l.b16 %v235
    %v566 = vunpack.c.h.b16 %v235
    %v567 = vunpack.c.l.b16 %v236
    %v568 = vunpack.c.h.b16 %v236
    %v569 = vunpack.c.l.b16 %v237
    %v570 = vunpack.c.h.b16 %v237
    %v571 = vunpack.c.l.b16 %v238
    %v572 = vunpack.c.h.b16 %v238
    %v573 = vunpack.c.l.b16 %v239
    %v574 = vunpack.c.h.b16 %v239
    %v575 = vunpack.c.l.b16 %v240
    %v576 = vunpack.c.h.b16 %v240
    %v577 = vunpack.c.l.b16 %v241
    %v578 = vunpack.c.h.b16 %v241
    %v579 = vunpack.c.l.b16 %v242
    %v580 = vunpack.c.h.b16 %v242
    %v581 = vunpack.c.l.b16 %v243
    %v582 = vunpack.c.h.b16 %v243
    %v583 = vunpack.c.l.b16 %v244
    %v584 = vunpack.c.h.b16 %v244
    %v585 = vunpack.c.l.b16 %v245
    %v586 = vunpack.c.h.b16 %v245
    %v587 = vunpack.c.l.b16 %v246
    %v588 = vunpack.c.h.b16 %v246
    %v589 = vunpack.c.l.b16 %v247
    %v590 = vunpack.c.h.b16 %v247
    %v591 = vunpack.c.l.b16 %v248
    %v592 = vunpack.c.h.b16 %v248
    %v593 = vunpack.c.l.b16 %v249
    %v594 = vunpack.c.h.b16 %v249
    %v595 = vunpack.c.l.b16 %v250
    %v596 = vunpack.c.h.b16 %v250
    %v597 = vunpack.c.l.b16 %v251
    %v598 = vunpack.c.h.b16 %v251
    %v599 = vunpack.c.l.b16 %v252
    %v600 = vunpack.c.h.b16 %v252
    %v601 = vunpack.c.l.b16 %v253
    %v602 = vunpack.c.h.b16 %v253
    %v603 = vunpack.c.l.b16 %v254
    %v604 = vunpack.c.h.b16 %v254
    %v605 = vunpack.c.l.b16 %v255
    %v606 = vunpack.c.h.b16 %v255
    %v607 = vunpack.c.l.b16 %v256
    %v608 = vunpack.c.h.b16 %v256
    %v609 = vunpack.c.l.b16 %v257
    %v610 = vunpack.c.h.b16 %v257
    %v611 = vunpack.c.l.b16 %v258
    %v612 = vunpack.c.h.b16 %v258
    %v613 = vunpack.c.l.b16 %v259
    %v614 = vunpack.c.h.b16 %v259
    %v615 = vunpack.c.l.b16 %v260
    %v616 = vunpack.c.h.b16 %v260
    %v617 = vunpack.c.l.b16 %v261
    %v618 = vunpack.c.h.b16 %v261
    %v619 = vunpack.c.l.b16 %v262
    %v620 = vunpack.c.h.b16 %v262
    %v621 = vunpack.c.l.b16 %v263
    %v622 = vunpack.c.h.b16 %v263
    %v623 = vunpack.c.l.b16 %v264
    %v624 = vunpack.c.h.b16 %v264
    %v625 = vunpack.c.l.b16 %v265
    %v626 = vunpack.c.h.b16 %v265
    %v627 = vunpack.c.l.b16 %v266
    %v628 = vunpack.c.h.b16 %v266
    %v629 = vunpack.c.l.b16 %v267
    %v630 = vunpack.c.h.b16 %v267
    %v631 = vunpack.c.l.b16 %v268
    %v632 = vunpack.c.h.b16 %v268
    %v633 = vunpack.c.l.b16 %v269
    %v634 = vunpack.c.h.b16 %v269
    %v635 = vunpack.c.l.b16 %v270
    %v636 = vunpack.c.h.b16 %v270
    %v637 = vunpack.c.l.b16 %v271
    %v638 = vunpack.c.h.b16 %v271
    %v639 = vunpack.c.l.b16 %v272
    %v640 = vunpack.c.h.b16 %v272
    %v641 = vunpack.c.l.b16 %v273
    %v642 = vunpack.c.h.b16 %v273
    %v643 = vunpack.c.l.b16 %v274
    %v644 = vunpack.c.h.b16 %v274
    %v645 = vunpack.c.l.b16 %v275
    %v646 = vunpack.c.h.b16 %v275
    %v647 = vunpack.c.l.b16 %v276
    %v648 = vunpack.c.h.b16 %v276
    %v649 = vunpack.c.l.b16 %v277
    %v650 = vunpack.c.h.b16 %v277
    %v651 = vunpack.c.l.b16 %v278
    %v652 = vunpack.c.h.b16 %v278
    %v653 = vunpack.c.l.b16 %v279
    %v654 = vunpack.c.h.b16 %v279
    %v655 = vunpack.c.l.b16 %v280
    %v656 = vunpack.c.h.b16 %v280
    %v657 = vunpack.c.l.b16 %v281
    %v658 = vunpack.c.h.b16 %v281
    %v659 = vunpack.c.l.b16 %v282
    %v660 = vunpack.c.h.b16 %v282
    %v661 = vunpack.c.l.b16 %v283
    %v662 = vunpack.c.h.b16 %v283
    %v663 = vunpack.c.l.b16 %v284
    %v664 = vunpack.c.h.b16 %v284
    %v665 = vunpack.c.l.b16 %v285
    %v666 = vunpack.c.h.b16 %v285
    %v667 = vunpack.c.l.b16 %v286
    %v668 = vunpack.c.h.b16 %v286
    %v669 = vunpack.c.l.b16 %v287
    %v670 = vunpack.c.h.b16 %v287
    %v671 = vunpack.c.l.b16 %v288
    %v672 = vunpack.c.h.b16 %v288
    %v673 = vunpack.c.l.b16 %v289
    %v674 = vunpack.c.h.b16 %v289
    %v675 = vunpack.c.l.b16 %v290
    %v676 = vunpack.c.h.b16 %v290
    %v677 = vunpack.c.l.b16 %v291
    %v678 = vunpack.c.h.b16 %v291
    %v679 = vunpack.c.l.b16 %v292
    %v680 = vunpack.c.h.b16 %v292
    %v681 = vunpack.c.l.b16 %v293
    %v682 = vunpack.c.h.b16 %v293
    %v683 = vunpack.c.l.b16 %v294
    %v684 = vunpack.c.h.b16 %v294
    %v685 = vunpack.c.l.b16 %v295
    %v686 = vunpack.c.h.b16 %v295
    %v687 = vunpack.c.l.b16 %v296
    %v688 = vunpack.c.h.b16 %v296
    %v689 = vunpack.c.l.b16 %v297
    %v690 = vunpack.c.h.b16 %v297
    %v691 = vunpack.c.l.b16 %v298
    %v692 = vunpack.c.h.b16 %v298
    %v693 = vunpack.c.l.b16 %v299
    %v694 = vunpack.c.h.b16 %v299
    %v695 = vunpack.c.l.b16 %v300
    %v696 = vunpack.c.h.b16 %v300
    %v697 = vunpack.c.l.b16 %v301
    %v698 = vunpack.c.h.b16 %v301
    %v699 = vunpack.c.l.b16 %v302
    %v700 = vunpack.c.h.b16 %v302
    %v701 = vunpack.c.l.b16 %v303
    %v702 = vunpack.c.h.b16 %v303
    %v703 = vunpack.c.l.b16 %v304
    %v704 = vunpack.c.h.b16 %v304
    %v705 = vunpack.c.l.b16 %v305
    %v706 = vunpack.c.h.b16 %v305
    %v707 = vunpack.c.l.b16 %v306
    %v708 = vunpack.c.h.b16 %v306
    %v709 = vunpack.c.l.b16 %v307
    %v710 = vunpack.c.h.b16 %v307
    %v711 = vunpack.c.l.b16 %v308
    %v712 = vunpack.c.h.b16 %v308
    %v713 = vunpack.c.l.b16 %v309
    %v714 = vunpack.c.h.b16 %v309
    %v715 = vunpack.c.l.b16 %v310
    %v716 = vunpack.c.h.b16 %v310
    %v717 = vpack.c.b16 %v465, %v461
    %v718 = vpack.c.b16 %v466, %v462
    %v719 = vpack.c.b16 %v467, %v463
    %v720 = vpack.c.b16 %v468, %v464
    %v721 = vpack.c.b16 %v473, %v469
    %v722 = vpack.c.b16 %v474, %v470
    %v723 = vpack.c.b16 %v475, %v471
    %v724 = vpack.c.b16 %v476, %v472
    %v725 = vpack.c.b16 %v481, %v477
    %v726 = vpack.c.b16 %v482, %v478
    %v727 = vpack.c.b16 %v483, %v479
    %v728 = vpack.c.b16 %v484, %v480
    %v729 = vpack.c.b16 %v489, %v485
    %v730 = vpack.c.b16 %v490, %v486
    %v731 = vpack.c.b16 %v491, %v487
    %v732 = vpack.c.b16 %v492, %v488
    %v733 = vpack.c.b16 %v497, %v493
    %v734 = vpack.c.b16 %v498, %v494
    %v735 = vpack.c.b16 %v499, %v495
    %v736 = vpack.c.b16 %v500, %v496
    %v737 = vpack.c.b16 %v505, %v501
    %v738 = vpack.c.b16 %v506, %v502
    %v739 = vpack.c.b16 %v507, %v503
    %v740 = vpack.c.b16 %v508, %v504
    %v741 = vpack.c.b16 %v513, %v509
    %v742 = vpack.c.b16 %v514, %v510
    %v743 = vpack.c.b16 %v515, %v511
    %v744 = vpack.c.b16 %v516, %v512
    %v745 = vpack.c.b16 %v521, %v517
    %v746 = vpack.c.b16 %v522, %v518
    %v747 = vpack.c.b16 %v523, %v519
    %v748 = vpack.c.b16 %v524, %v520
    %v749 = vpack.c.b16 %v529, %v525
    %v750 = vpack.c.b16 %v530, %v526
    %v751 = vpack.c.b16 %v531, %v527
    %v752 = vpack.c.b16 %v532, %v528
    %v753 = vpack.c.b16 %v537, %v533
    %v754 = vpack.c.b16 %v538, %v534
    %v755 = vpack.c.b16 %v539, %v535
    %v756 = vpack.c.b16 %v540, %v536
    %v757 = vpack.c.b16 %v545, %v541
    %v758 = vpack.c.b16 %v546, %v542
    %v759 = vpack.c.b16 %v547, %v543
    %v760 = vpack.c.b16 %v548, %v544
    %v761 = vpack.c.b16 %v553, %v549
    %v762 = vpack.c.b16 %v554, %v550
    %v763 = vpack.c.b16 %v555, %v551
    %v764 = vpack.c.b16 %v556, %v552
    %v765 = vpack.c.b16 %v561, %v557
    %v766 = vpack.c.b16 %v562, %v558
    %v767 = vpack.c.b16 %v563, %v559
    %v768 = vpack.c.b16 %v564, %v560
    %v769 = vpack.c.b16 %v569, %v565
    %v770 = vpack.c.b16 %v570, %v566
    %v771 = vpack.c.b16 %v571, %v567
    %v772 = vpack.c.b16 %v572, %v568
    %v773 = vpack.c.b16 %v577, %v573
    %v774 = vpack.c.b16 %v578, %v574
    %v775 = vpack.c.b16 %v579, %v575
    %v776 = vpack.c.b16 %v580, %v576
    %v777 = vpack.c.b16 %v585, %v581
    %v778 = vpack.c.b16 %v586, %v582
    %v779 = vpack.c.b16 %v587, %v583
    %v780 = vpack.c.b16 %v588, %v584
    %v781 = vpack.c.b16 %v593, %v589
    %v782 = vpack.c.b16 %v594, %v590
    %v783 = vpack.c.b16 %v595, %v591
    %v784 = vpack.c.b16 %v596, %v592
    %v785 = vpack.c.b16 %v601, %v597
    %v786 = vpack.c.b16 %v602, %v598
    %v787 = vpack.c.b16 %v603, %v599
    %v788 = vpack.c.b16 %v604, %v600
    %v789 = vpack.c.b16 %v609, %v605
    %v790 = vpack.c.b16 %v610, %v606
    %v791 = vpack.c.b16 %v611, %v607
    %v792 = vpack.c.b16 %v612, %v608
    %v793 = vpack.c.b16 %v617, %v613
    %v794 = vpack.c.b16 %v618, %v614
    %v795 = vpack.c.b16 %v619, %v615
    %v796 = vpack.c.b16 %v620, %v616
    %v797 = vpack.c.b16 %v625, %v621
    %v798 = vpack.c.b16 %v626, %v622
    %v799 = vpack.c.b16 %v627, %v623
    %v800 = vpack.c.b16 %v628, %v624
    %v801 = vpack.c.b16 %v633, %v629
    %v802 = vpack.c.b16 %v634, %v630
    %v803 = vpack.c.b16 %v635, %v631
    %v804 = vpack.c.b16 %v636, %v632
    %v805 = vpack.c.b16 %v641, %v637
    %v806 = vpack.c.b16 %v642, %v638
    %v807 = vpack.c.b16 %v643, %v639
    %v808 = vpack.c.b16 %v644, %v640
    %v809 = vpack.c.b16 %v649, %v645
    %v810 = vpack.c.b16 %v650, %v646
    %v811 = vpack.c.b16 %v651, %v647
    %v812 = vpack.c.b16 %v652, %v648
    %v813 = vpack.c.b16 %v657, %v653
    %v814 = vpack.c.b16 %v658, %v654
    %v815 = vpack.c.b16 %v659, %v655
    %v816 = vpack.c.b16 %v660, %v656
    %v817 = vpack.c.b16 %v665, %v661
    %v818 = vpack.c.b16 %v666, %v662
    %v819 = vpack.c.b16 %v667, %v663
    %v820 = vpack.c.b16 %v668, %v664
    %v821 = vpack.c.b16 %v673, %v669
    %v822 = vpack.c.b16 %v674, %v670
    %v823 = vpack.c.b16 %v675, %v671
    %v824 = vpack.c.b16 %v676, %v672
    %v825 = vpack.c.b16 %v681, %v677
    %v826 = vpack.c.b16 %v682, %v678
    %v827 = vpack.c.b16 %v683, %v679
    %v828 = vpack.c.b16 %v684, %v680
    %v829 = vpack.c.b16 %v689, %v685
    %v830 = vpack.c.b16 %v690, %v686
    %v831 = vpack.c.b16 %v691, %v687
    %v832 = vpack.c.b16 %v692, %v688
    %v833 = vpack.c.b16 %v697, %v693
    %v834 = vpack.c.b16 %v698, %v694
    %v835 = vpack.c.b16 %v699, %v695
    %v836 = vpack.c.b16 %v700, %v696
    %v837 = vpack.c.b16 %v705, %v701
    %v838 = vpack.c.b16 %v706, %v702
    %v839 = vpack.c.b16 %v707, %v703
    %v840 = vpack.c.b16 %v708, %v704
    %v841 = vpack.c.b16 %v713, %v709
    %v842 = vpack.c.b16 %v714, %v710
    %v843 = vpack.c.b16 %v715, %v711
    %v844 = vpack.c.b16 %v716, %v712
    %973 = vmatprep.subr.bf16.mxu0 %v718
    %974 = vmatpush1.bf16.msra.mxu0 %v717
    %975 = vmatprep.subr.bf16.mxu0 %v722
    %976 = vmatpush1.bf16.msra.mxu0 %v721
    %977 = vmatprep.subr.bf16.mxu0 %v726
    %978 = vmatpush1.bf16.msra.mxu0 %v725
    %979 = vmatprep.subr.bf16.mxu0 %v730
    %980 = vmatpush1.bf16.msra.mxu0 %v729
    %981 = vmatprep.subr.bf16.mxu0 %v734
    %982 = vmatpush1.bf16.msra.mxu0 %v733
    %983 = vmatprep.subr.bf16.mxu0 %v738
    %984 = vmatpush1.bf16.msra.mxu0 %v737
    %985 = vmatprep.subr.bf16.mxu0 %v742
    %986 = vmatpush1.bf16.msra.mxu0 %v741
    %987 = vmatprep.subr.bf16.mxu0 %v746
    %988 = vmatpush1.bf16.msra.mxu0 %v745
    %989 = vmatprep.subr.bf16.mxu0 %v750
    %990 = vmatpush1.bf16.msra.mxu0 %v749
    %991 = vmatprep.subr.bf16.mxu0 %v754
    %992 = vmatpush1.bf16.msra.mxu0 %v753
    %993 = vmatprep.subr.bf16.mxu0 %v758
    %994 = vmatpush1.bf16.msra.mxu0 %v757
    %995 = vmatprep.subr.bf16.mxu0 %v762
    %996 = vmatpush1.bf16.msra.mxu0 %v761
    %997 = vmatprep.subr.bf16.mxu0 %v766
    %998 = vmatpush1.bf16.msra.mxu0 %v765
    %999 = vmatprep.subr.bf16.mxu0 %v770
    %1000 = vmatpush1.bf16.msra.mxu0 %v769
    %1001 = vmatprep.subr.bf16.mxu0 %v774
    %1002 = vmatpush1.bf16.msra.mxu0 %v773
    %1003 = vmatprep.subr.bf16.mxu0 %v778
    %1004 = vmatpush1.bf16.msra.mxu0 %v777
    %1005 = vmatprep.mubr.bf16.mxu0 %v180
    %1006 = vmatmul.mubr.bf16.gmra.mrb[0].mxu0 %v179
    %v1007 = vpop.f32.mrb[0].mxu0
    %v1008 = vadd.f32 %v316, %v1007
    %v1009 = vpop.f32.mrb[0].mxu0
    %v1010 = vadd.f32 %v320, %v1009
    %v1011 = vpop.f32.mrb[0].mxu0
    %v1012 = vpop.f32.mrb[0].mxu0
    %1013 = vdwg.mxu0
    %1014 = vmatprep.subr.bf16.mxu0 %v782
    %1015 = vmatpush1.bf16.msra.mxu0 %v781
    %1016 = vmatprep.subr.bf16.mxu0 %v786
    %1017 = vmatpush1.bf16.msra.mxu0 %v785
    %1018 = vmatprep.subr.bf16.mxu0 %v790
    %1019 = vmatpush1.bf16.msra.mxu0 %v789
    %1020 = vmatprep.subr.bf16.mxu0 %v794
    %1021 = vmatpush1.bf16.msra.mxu0 %v793
    %1022 = vmatprep.subr.bf16.mxu0 %v798
    %1023 = vmatpush1.bf16.msra.mxu0 %v797
    %1024 = vmatprep.subr.bf16.mxu0 %v802
    %1025 = vmatpush1.bf16.msra.mxu0 %v801
    %1026 = vmatprep.subr.bf16.mxu0 %v806
    %1027 = vmatpush1.bf16.msra.mxu0 %v805
    %1028 = vmatprep.subr.bf16.mxu0 %v810
    %1029 = vmatpush1.bf16.msra.mxu0 %v809
    %1030 = vmatprep.subr.bf16.mxu0 %v814
    %1031 = vmatpush1.bf16.msra.mxu0 %v813
    %1032 = vmatprep.subr.bf16.mxu0 %v818
    %1033 = vmatpush1.bf16.msra.mxu0 %v817
    %1034 = vmatprep.subr.bf16.mxu0 %v822
    %1035 = vmatpush1.bf16.msra.mxu0 %v821
    %1036 = vmatprep.subr.bf16.mxu0 %v826
    %1037 = vmatpush1.bf16.msra.mxu0 %v825
    %1038 = vmatprep.subr.bf16.mxu0 %v830
    %1039 = vmatpush1.bf16.msra.mxu0 %v829
    %1040 = vmatprep.subr.bf16.mxu0 %v834
    %1041 = vmatpush1.bf16.msra.mxu0 %v833
    %1042 = vmatprep.subr.bf16.mxu0 %v838
    %1043 = vmatpush1.bf16.msra.mxu0 %v837
    %1044 = vmatprep.subr.bf16.mxu0 %v842
    %1045 = vmatpush1.bf16.msra.mxu0 %v841
    %1046 = vmatprep.mubr.bf16.mxu0 %v182
    %1047 = vmatmul.mubr.bf16.gmra.mrb[0].mxu0 %v181
    %v1048 = vpop.f32.mrb[0].mxu0
    %v1049 = vadd.f32 %v1008, %v1048
    %v1050 = vpop.f32.mrb[0].mxu0
    %v1051 = vadd.f32 %v1010, %v1050
    %v1052 = vpop.f32.mrb[0].mxu0
    %v1053 = vpop.f32.mrb[0].mxu0
    %1054 = vdwg.mxu0
    %1055 = vmatprep.subr.bf16.mxu0 %v720
    %1056 = vmatpush1.bf16.msra.mxu0 %v719
    %1057 = vmatprep.subr.bf16.mxu0 %v724
    %1058 = vmatpush1.bf16.msra.mxu0 %v723
    %1059 = vmatprep.subr.bf16.mxu0 %v728
    %1060 = vmatpush1.bf16.msra.mxu0 %v727
    %1061 = vmatprep.subr.bf16.mxu0 %v732
    %1062 = vmatpush1.bf16.msra.mxu0 %v731
    %1063 = vmatprep.subr.bf16.mxu0 %v736
    %1064 = vmatpush1.bf16.msra.mxu0 %v735
    %1065 = vmatprep.subr.bf16.mxu0 %v740
    %1066 = vmatpush1.bf16.msra.mxu0 %v739
    %1067 = vmatprep.subr.bf16.mxu0 %v744
    %1068 = vmatpush1.bf16.msra.mxu0 %v743
    %1069 = vmatprep.subr.bf16.mxu0 %v748
    %1070 = vmatpush1.bf16.msra.mxu0 %v747
    %1071 = vmatprep.subr.bf16.mxu0 %v752
    %1072 = vmatpush1.bf16.msra.mxu0 %v751
    %1073 = vmatprep.subr.bf16.mxu0 %v756
    %1074 = vmatpush1.bf16.msra.mxu0 %v755
    %1075 = vmatprep.subr.bf16.mxu0 %v760
    %1076 = vmatpush1.bf16.msra.mxu0 %v759
    %1077 = vmatprep.subr.bf16.mxu0 %v764
    %1078 = vmatpush1.bf16.msra.mxu0 %v763
    %1079 = vmatprep.subr.bf16.mxu0 %v768
    %1080 = vmatpush1.bf16.msra.mxu0 %v767
    %1081 = vmatprep.subr.bf16.mxu0 %v772
    %1082 = vmatpush1.bf16.msra.mxu0 %v771
    %1083 = vmatprep.subr.bf16.mxu0 %v776
    %1084 = vmatpush1.bf16.msra.mxu0 %v775
    %1085 = vmatprep.subr.bf16.mxu0 %v780
    %1086 = vmatpush1.bf16.msra.mxu0 %v779
    %1087 = vmatprep.mubr.bf16.mxu0 %v180
    %1088 = vmatmul.mubr.bf16.gmra.mrb[0].mxu0 %v179
    %v1089 = vpop.f32.mrb[0].mxu0
    %v1090 = vadd.f32 %v324, %v1089
    %v1091 = vpop.f32.mrb[0].mxu0
    %v1092 = vadd.f32 %v328, %v1091
    %v1093 = vpop.f32.mrb[0].mxu0
    %v1094 = vpop.f32.mrb[0].mxu0
    %1095 = vdwg.mxu0
    %1096 = vmatprep.subr.bf16.mxu0 %v784
    %1097 = vmatpush1.bf16.msra.mxu0 %v783
    %1098 = vmatprep.subr.bf16.mxu0 %v788
    %1099 = vmatpush1.bf16.msra.mxu0 %v787
    %1100 = vmatprep.subr.bf16.mxu0 %v792
    %1101 = vmatpush1.bf16.msra.mxu0 %v791
    %1102 = vmatprep.subr.bf16.mxu0 %v796
    %1103 = vmatpush1.bf16.msra.mxu0 %v795
    %1104 = vmatprep.subr.bf16.mxu0 %v800
    %1105 = vmatpush1.bf16.msra.mxu0 %v799
    %1106 = vmatprep.subr.bf16.mxu0 %v804
    %1107 = vmatpush1.bf16.msra.mxu0 %v803
    %1108 = vmatprep.subr.bf16.mxu0 %v808
    %1109 = vmatpush1.bf16.msra.mxu0 %v807
    %1110 = vmatprep.subr.bf16.mxu0 %v812
    %1111 = vmatpush1.bf16.msra.mxu0 %v811
    %1112 = vmatprep.subr.bf16.mxu0 %v816
    %1113 = vmatpush1.bf16.msra.mxu0 %v815
    %1114 = vmatprep.subr.bf16.mxu0 %v820
    %1115 = vmatpush1.bf16.msra.mxu0 %v819
    %1116 = vmatprep.subr.bf16.mxu0 %v824
    %1117 = vmatpush1.bf16.msra.mxu0 %v823
    %1118 = vmatprep.subr.bf16.mxu0 %v828
    %1119 = vmatpush1.bf16.msra.mxu0 %v827
    %1120 = vmatprep.subr.bf16.mxu0 %v832
    %1121 = vmatpush1.bf16.msra.mxu0 %v831
    %1122 = vmatprep.subr.bf16.mxu0 %v836
    %1123 = vmatpush1.bf16.msra.mxu0 %v835
    %1124 = vmatprep.subr.bf16.mxu0 %v840
    %1125 = vmatpush1.bf16.msra.mxu0 %v839
    %1126 = vmatprep.subr.bf16.mxu0 %v844
    %1127 = vmatpush1.bf16.msra.mxu0 %v843
    %1128 = vmatprep.mubr.bf16.mxu0 %v182
    %1129 = vmatmul.mubr.bf16.gmra.mrb[0].mxu0 %v181
    %v1130 = vpop.f32.mrb[0].mxu0
    %v1131 = vadd.f32 %v1090, %v1130
    %v1132 = vpop.f32.mrb[0].mxu0
    %v1133 = vadd.f32 %v1092, %v1132
    %v1134 = vpop.f32.mrb[0].mxu0
    %v1135 = vpop.f32.mrb[0].mxu0
    %1136 = vdwg.mxu0
    %v1137 = vmax.f32 %v1049, 0.0
    %v1138 = vmax.f32 %v1051, 0.0
    %v1139 = vmax.f32 %v1131, 0.0
    %v1140 = vmax.f32 %v1133, 0.0
    %v1141 = vpack.c.bf16 %v1137, %v1137
    %v1142 = vpack.c.bf16 %v1138, %v1138
    %v1143 = vpack.c.bf16 %v1139, %v1139
    %v1144 = vpack.c.bf16 %v1140, %v1140
    %v1145 = vld [vmem:[%s5] sm:$0xf]
    %v1146 = vld [vmem:[%s5 + $0x4] sm:$0xf]
    %v1147 = vld [vmem:[%s5 + $0x8] sm:$0xf]
    %v1148 = vld [vmem:[%s5 + $0xc] sm:$0xf]
    %v1149 = vld [vmem:[%s5 + $0x10] sm:$0xf]
    %v1150 = vld [vmem:[%s5 + $0x14] sm:$0xf]
    %v1151 = vld [vmem:[%s5 + $0x18] sm:$0xf]
    %v1152 = vld [vmem:[%s5 + $0x1c] sm:$0xf]
    %v1153 = vld [vmem:[%s5 + $0x20] sm:$0xf]
    %v1154 = vld [vmem:[%s5 + $0x24] sm:$0xf]
    %v1155 = vld [vmem:[%s5 + $0x28] sm:$0xf]
    %v1156 = vld [vmem:[%s5 + $0x2c] sm:$0xf]
    %v1157 = vld [vmem:[%s5 + $0x30] sm:$0xf]
    %v1158 = vld [vmem:[%s5 + $0x34] sm:$0xf]
    %v1159 = vld [vmem:[%s5 + $0x38] sm:$0xf]
    %v1160 = vld [vmem:[%s5 + $0x3c] sm:$0xf]
    %v1161 = vld [vmem:[%s5 + $0x40] sm:$0xf]
    %v1162 = vld [vmem:[%s5 + $0x44] sm:$0xf]
    %v1163 = vld [vmem:[%s5 + $0x48] sm:$0xf]
    %v1164 = vld [vmem:[%s5 + $0x4c] sm:$0xf]
    %v1165 = vld [vmem:[%s5 + $0x50] sm:$0xf]
    %v1166 = vld [vmem:[%s5 + $0x54] sm:$0xf]
    %v1167 = vld [vmem:[%s5 + $0x58] sm:$0xf]
    %v1168 = vld [vmem:[%s5 + $0x5c] sm:$0xf]
    %v1169 = vld [vmem:[%s5 + $0x60] sm:$0xf]
    %v1170 = vld [vmem:[%s5 + $0x64] sm:$0xf]
    %v1171 = vld [vmem:[%s5 + $0x68] sm:$0xf]
    %v1172 = vld [vmem:[%s5 + $0x6c] sm:$0xf]
    %v1173 = vld [vmem:[%s5 + $0x70] sm:$0xf]
    %v1174 = vld [vmem:[%s5 + $0x74] sm:$0xf]
    %v1175 = vld [vmem:[%s5 + $0x78] sm:$0xf]
    %v1176 = vld [vmem:[%s5 + $0x7c] sm:$0xf]
    %v1177 = vld [vmem:[%s5 + $0x80] sm:$0xf]
    %v1178 = vld [vmem:[%s5 + $0x84] sm:$0xf]
    %v1179 = vld [vmem:[%s5 + $0x88] sm:$0xf]
    %v1180 = vld [vmem:[%s5 + $0x8c] sm:$0xf]
    %v1181 = vld [vmem:[%s5 + $0x90] sm:$0xf]
    %v1182 = vld [vmem:[%s5 + $0x94] sm:$0xf]
    %v1183 = vld [vmem:[%s5 + $0x98] sm:$0xf]
    %v1184 = vld [vmem:[%s5 + $0x9c] sm:$0xf]
    %v1185 = vld [vmem:[%s5 + $0xa0] sm:$0xf]
    %v1186 = vld [vmem:[%s5 + $0xa4] sm:$0xf]
    %v1187 = vld [vmem:[%s5 + $0xa8] sm:$0xf]
    %v1188 = vld [vmem:[%s5 + $0xac] sm:$0xf]
    %v1189 = vld [vmem:[%s5 + $0xb0] sm:$0xf]
    %v1190 = vld [vmem:[%s5 + $0xb4] sm:$0xf]
    %v1191 = vld [vmem:[%s5 + $0xb8] sm:$0xf]
    %v1192 = vld [vmem:[%s5 + $0xbc] sm:$0xf]
    %v1193 = vld [vmem:[%s5 + $0xc0] sm:$0xf]
    %v1194 = vld [vmem:[%s5 + $0xc4] sm:$0xf]
    %v1195 = vld [vmem:[%s5 + $0xc8] sm:$0xf]
    %v1196 = vld [vmem:[%s5 + $0xcc] sm:$0xf]
    %v1197 = vld [vmem:[%s5 + $0xd0] sm:$0xf]
    %v1198 = vld [vmem:[%s5 + $0xd4] sm:$0xf]
    %v1199 = vld [vmem:[%s5 + $0xd8] sm:$0xf]
    %v1200 = vld [vmem:[%s5 + $0xdc] sm:$0xf]
    %v1201 = vld [vmem:[%s5 + $0xe0] sm:$0xf]
    %v1202 = vld [vmem:[%s5 + $0xe4] sm:$0xf]
    %v1203 = vld [vmem:[%s5 + $0xe8] sm:$0xf]
    %v1204 = vld [vmem:[%s5 + $0xec] sm:$0xf]
    %v1205 = vld [vmem:[%s5 + $0xf0] sm:$0xf]
    %v1206 = vld [vmem:[%s5 + $0xf4] sm:$0xf]
    %v1207 = vld [vmem:[%s5 + $0xf8] sm:$0xf]
    %v1208 = vld [vmem:[%s5 + $0xfc] sm:$0xf]
    %v1209 = vld [vmem:[%s6] sm:$0x1]
    %v1211 = vlaneseq
    %v1212 = vshrl.u32 %v1211, 7
    %v1213 = vsub.s32 0, %v1212
    %v1214 = vrot.slane %v1209, %v1213
    %v1280 = vunpack.c.l.b16 %v1145
    %v1281 = vunpack.c.l.b16 %v1146
    %v1282 = vunpack.c.l.b16 %v1147
    %v1283 = vunpack.c.l.b16 %v1148
    %v1284 = vunpack.c.l.b16 %v1149
    %v1285 = vunpack.c.l.b16 %v1150
    %v1286 = vunpack.c.l.b16 %v1151
    %v1287 = vunpack.c.l.b16 %v1152
    %v1288 = vunpack.c.l.b16 %v1153
    %v1289 = vunpack.c.l.b16 %v1154
    %v1290 = vunpack.c.l.b16 %v1155
    %v1291 = vunpack.c.l.b16 %v1156
    %v1292 = vunpack.c.l.b16 %v1157
    %v1293 = vunpack.c.l.b16 %v1158
    %v1294 = vunpack.c.l.b16 %v1159
    %v1295 = vunpack.c.l.b16 %v1160
    %v1296 = vunpack.c.l.b16 %v1161
    %v1297 = vunpack.c.l.b16 %v1162
    %v1298 = vunpack.c.l.b16 %v1163
    %v1299 = vunpack.c.l.b16 %v1164
    %v1300 = vunpack.c.l.b16 %v1165
    %v1301 = vunpack.c.l.b16 %v1166
    %v1302 = vunpack.c.l.b16 %v1167
    %v1303 = vunpack.c.l.b16 %v1168
    %v1304 = vunpack.c.l.b16 %v1169
    %v1305 = vunpack.c.l.b16 %v1170
    %v1306 = vunpack.c.l.b16 %v1171
    %v1307 = vunpack.c.l.b16 %v1172
    %v1308 = vunpack.c.l.b16 %v1173
    %v1309 = vunpack.c.l.b16 %v1174
    %v1310 = vunpack.c.l.b16 %v1175
    %v1311 = vunpack.c.l.b16 %v1176
    %v1312 = vunpack.c.l.b16 %v1177
    %v1313 = vunpack.c.l.b16 %v1178
    %v1314 = vunpack.c.l.b16 %v1179
    %v1315 = vunpack.c.l.b16 %v1180
    %v1316 = vunpack.c.l.b16 %v1181
    %v1317 = vunpack.c.l.b16 %v1182
    %v1318 = vunpack.c.l.b16 %v1183
    %v1319 = vunpack.c.l.b16 %v1184
    %v1320 = vunpack.c.l.b16 %v1185
    %v1321 = vunpack.c.l.b16 %v1186
    %v1322 = vunpack.c.l.b16 %v1187
    %v1323 = vunpack.c.l.b16 %v1188
    %v1324 = vunpack.c.l.b16 %v1189
    %v1325 = vunpack.c.l.b16 %v1190
    %v1326 = vunpack.c.l.b16 %v1191
    %v1327 = vunpack.c.l.b16 %v1192
    %v1328 = vunpack.c.l.b16 %v1193
    %v1329 = vunpack.c.l.b16 %v1194
    %v1330 = vunpack.c.l.b16 %v1195
    %v1331 = vunpack.c.l.b16 %v1196
    %v1332 = vunpack.c.l.b16 %v1197
    %v1333 = vunpack.c.l.b16 %v1198
    %v1334 = vunpack.c.l.b16 %v1199
    %v1335 = vunpack.c.l.b16 %v1200
    %v1336 = vunpack.c.l.b16 %v1201
    %v1337 = vunpack.c.l.b16 %v1202
    %v1338 = vunpack.c.l.b16 %v1203
    %v1339 = vunpack.c.l.b16 %v1204
    %v1340 = vunpack.c.l.b16 %v1205
    %v1341 = vunpack.c.l.b16 %v1206
    %v1342 = vunpack.c.l.b16 %v1207
    %v1343 = vunpack.c.l.b16 %v1208
    %v1344 = vpack.c.b16 %v1281, %v1280
    %v1345 = vpack.c.b16 %v1283, %v1282
    %v1346 = vpack.c.b16 %v1285, %v1284
    %v1347 = vpack.c.b16 %v1287, %v1286
    %v1348 = vpack.c.b16 %v1289, %v1288
    %v1349 = vpack.c.b16 %v1291, %v1290
    %v1350 = vpack.c.b16 %v1293, %v1292
    %v1351 = vpack.c.b16 %v1295, %v1294
    %v1352 = vpack.c.b16 %v1297, %v1296
    %v1353 = vpack.c.b16 %v1299, %v1298
    %v1354 = vpack.c.b16 %v1301, %v1300
    %v1355 = vpack.c.b16 %v1303, %v1302
    %v1356 = vpack.c.b16 %v1305, %v1304
    %v1357 = vpack.c.b16 %v1307, %v1306
    %v1358 = vpack.c.b16 %v1309, %v1308
    %v1359 = vpack.c.b16 %v1311, %v1310
    %v1360 = vpack.c.b16 %v1313, %v1312
    %v1361 = vpack.c.b16 %v1315, %v1314
    %v1362 = vpack.c.b16 %v1317, %v1316
    %v1363 = vpack.c.b16 %v1319, %v1318
    %v1364 = vpack.c.b16 %v1321, %v1320
    %v1365 = vpack.c.b16 %v1323, %v1322
    %v1366 = vpack.c.b16 %v1325, %v1324
    %v1367 = vpack.c.b16 %v1327, %v1326
    %v1368 = vpack.c.b16 %v1329, %v1328
    %v1369 = vpack.c.b16 %v1331, %v1330
    %v1370 = vpack.c.b16 %v1333, %v1332
    %v1371 = vpack.c.b16 %v1335, %v1334
    %v1372 = vpack.c.b16 %v1337, %v1336
    %v1373 = vpack.c.b16 %v1339, %v1338
    %v1374 = vpack.c.b16 %v1341, %v1340
    %v1375 = vpack.c.b16 %v1343, %v1342
    %1408 = vmatprep.subr.bf16.mxu0 0
    %1409 = vmatpush1.bf16.msra.mxu0 %v1344
    %1410 = vmatprep.subr.bf16.mxu0 0
    %1411 = vmatpush1.bf16.msra.mxu0 %v1345
    %1412 = vmatprep.subr.bf16.mxu0 0
    %1413 = vmatpush1.bf16.msra.mxu0 %v1346
    %1414 = vmatprep.subr.bf16.mxu0 0
    %1415 = vmatpush1.bf16.msra.mxu0 %v1347
    %1416 = vmatprep.subr.bf16.mxu0 0
    %1417 = vmatpush1.bf16.msra.mxu0 %v1348
    %1418 = vmatprep.subr.bf16.mxu0 0
    %1419 = vmatpush1.bf16.msra.mxu0 %v1349
    %1420 = vmatprep.subr.bf16.mxu0 0
    %1421 = vmatpush1.bf16.msra.mxu0 %v1350
    %1422 = vmatprep.subr.bf16.mxu0 0
    %1423 = vmatpush1.bf16.msra.mxu0 %v1351
    %1424 = vmatprep.subr.bf16.mxu0 0
    %1425 = vmatpush1.bf16.msra.mxu0 %v1352
    %1426 = vmatprep.subr.bf16.mxu0 0
    %1427 = vmatpush1.bf16.msra.mxu0 %v1353
    %1428 = vmatprep.subr.bf16.mxu0 0
    %1429 = vmatpush1.bf16.msra.mxu0 %v1354
    %1430 = vmatprep.subr.bf16.mxu0 0
    %1431 = vmatpush1.bf16.msra.mxu0 %v1355
    %1432 = vmatprep.subr.bf16.mxu0 0
    %1433 = vmatpush1.bf16.msra.mxu0 %v1356
    %1434 = vmatprep.subr.bf16.mxu0 0
    %1435 = vmatpush1.bf16.msra.mxu0 %v1357
    %1436 = vmatprep.subr.bf16.mxu0 0
    %1437 = vmatpush1.bf16.msra.mxu0 %v1358
    %1438 = vmatprep.subr.bf16.mxu0 0
    %1439 = vmatpush1.bf16.msra.mxu0 %v1359
    %1440 = vmatprep.mubr.bf16.mxu0 %v1142
    %1441 = vmatmul.mubr.bf16.gmra.mrb[0].mxu0 %v1141
    %v1442 = vpop.f32.mrb[0].mxu0
    %v1443 = vadd.f32 %v1214, %v1442
    %v1444 = vpop.f32.mrb[0].mxu0
    %v1445 = vpop.f32.mrb[0].mxu0
    %v1446 = vpop.f32.mrb[0].mxu0
    %1447 = vdwg.mxu0
    %1448 = vmatprep.subr.bf16.mxu0 0
    %1449 = vmatpush1.bf16.msra.mxu0 %v1360
    %1450 = vmatprep.subr.bf16.mxu0 0
    %1451 = vmatpush1.bf16.msra.mxu0 %v1361
    %1452 = vmatprep.subr.bf16.mxu0 0
    %1453 = vmatpush1.bf16.msra.mxu0 %v1362
    %1454 = vmatprep.subr.bf16.mxu0 0
    %1455 = vmatpush1.bf16.msra.mxu0 %v1363
    %1456 = vmatprep.subr.bf16.mxu0 0
    %1457 = vmatpush1.bf16.msra.mxu0 %v1364
    %1458 = vmatprep.subr.bf16.mxu0 0
    %1459 = vmatpush1.bf16.msra.mxu0 %v1365
    %1460 = vmatprep.subr.bf16.mxu0 0
    %1461 = vmatpush1.bf16.msra.mxu0 %v1366
    %1462 = vmatprep.subr.bf16.mxu0 0
    %1463 = vmatpush1.bf16.msra.mxu0 %v1367
    %1464 = vmatprep.subr.bf16.mxu0 0
    %1465 = vmatpush1.bf16.msra.mxu0 %v1368
    %1466 = vmatprep.subr.bf16.mxu0 0
    %1467 = vmatpush1.bf16.msra.mxu0 %v1369
    %1468 = vmatprep.subr.bf16.mxu0 0
    %1469 = vmatpush1.bf16.msra.mxu0 %v1370
    %1470 = vmatprep.subr.bf16.mxu0 0
    %1471 = vmatpush1.bf16.msra.mxu0 %v1371
    %1472 = vmatprep.subr.bf16.mxu0 0
    %1473 = vmatpush1.bf16.msra.mxu0 %v1372
    %1474 = vmatprep.subr.bf16.mxu0 0
    %1475 = vmatpush1.bf16.msra.mxu0 %v1373
    %1476 = vmatprep.subr.bf16.mxu0 0
    %1477 = vmatpush1.bf16.msra.mxu0 %v1374
    %1478 = vmatprep.subr.bf16.mxu0 0
    %1479 = vmatpush1.bf16.msra.mxu0 %v1375
    %1480 = vmatprep.mubr.bf16.mxu0 %v1144
    %1481 = vmatmul.mubr.bf16.gmra.mrb[0].mxu0 %v1143
    %v1482 = vpop.f32.mrb[0].mxu0
    %v1483 = vadd.f32 %v1443, %v1482
    %v1484 = vpop.f32.mrb[0].mxu0
    %v1485 = vpop.f32.mrb[0].mxu0
    %v1486 = vpop.f32.mrb[0].mxu0
    %1487 = vdwg.mxu0
    %v1488 = vtanh.pop %v1483
    %vm1489 = vcmask 64512
    %1490 = vst.msk [vmem:[%s7] sm:$0xff] %vm1489, %v1488
    // Predicated region
    $region34: #{actor_nd_suff_stats.1} parent=1 // pred_check
      _
    $region35: #{actor_nd_suff_stats.1} parent=1 // pred_check_branch
      %1492 = sbr.rel (0) target = $region37
    $region36: #{actor_nd_suff_stats.1} parent=1 // pred_region
      _
    $region37: #{actor_nd_suff_stats.1} parent=1 // pred_fallthru
      _
    // Predicated region
    $region38: #{actor_nd_suff_stats.1} parent=1 // pred_check
      _
    $region39: #{actor_nd_suff_stats.1} parent=1 // pred_check_branch
      %1494 = sbr.rel (0) target = $region41
    $region40: #{actor_nd_suff_stats.1} parent=1 // pred_region
      _
    $region41: #{actor_nd_suff_stats.1} parent=1 // pred_fallthru
      _
    %1495 = vsyncpa [#allocation3], 1

</llo_original>
